<compile_context>
chip_gen: v6e
topology: v6e:2x2x1
jax: 0.10.0
libtpu: 0.0.40
codegen_flags: <defaults>
</compile_context>

<pallas_src>
import functools

import jax
import jax.numpy as jnp
from jax import lax
from jax.experimental import pallas as pl
from jax.experimental.pallas import tpu as pltpu


def _round_up(v, m):
    return (v + m - 1) // m * m


def _vmem_limit_bytes():
    """Generation-aware scoped-VMEM limit: ~3/4 of physical on 128-MiB parts
    (v5e/v6e), conservative 48 MiB on 64-MiB v7x."""
    try:
        cap = pltpu.get_tpu_info().vmem_capacity_bytes
    except Exception:  # off-TPU / older runtime — fall back to the safe value
        cap = 64 * 1024 * 1024
    if cap >= 100 * 1024 * 1024:
        return 96 * 1024 * 1024
    return 48 * 1024 * 1024


def _choose_tiling(np_lanes, cap):
    """Pick a spatial tile (multiple of 128 lanes) that divides the padded N.

    If Np fits under the lane cap, use a single tile.  Otherwise prefer the
    largest divisor of Np under the cap; only when Np's divisors are awkward
    (best tile < cap/2) allow a small (<~6%) extra pad to use a near-cap tile.
    Returns (tile_n, padded_N).
    """
    if np_lanes <= cap:
        return np_lanes, np_lanes
    k = np_lanes // 128
    best = 1
    d = 1
    while d * d <= k:
        if k % d == 0:
            if d * 128 <= cap:
                best = max(best, d)
            q = k // d
            if q * 128 <= cap:
                best = max(best, q)
        d += 1
    tn = best * 128
    if tn * 2 < cap:
        tn2 = (cap // 128) * 128
        np2 = _round_up(np_lanes, tn2)
        if np2 - np_lanes <= max(128, np_lanes // 16):
            return tn2, np2
    return tn, np_lanes


def _softmax_from_energy(energy, num_valid):
    """softmax(rowmax(E) - E) == exp(rowmin(E) - E) / sum(exp(rowmin(E) - E)).

    One row reduction + one elementwise pass; padded channel columns
    (index >= num_valid) are masked out of the reduction / softmax.
    """
    cp = energy.shape[-1]
    if num_valid < cp:
        col_valid = lax.broadcasted_iota(jnp.int32, (cp, cp), 1) < num_valid
        rmin = jnp.min(jnp.where(col_valid, energy, jnp.inf),
                       axis=-1, keepdims=True)
        e = jnp.where(col_valid, jnp.exp(rmin - energy), 0.0)
    else:
        rmin = jnp.min(energy, axis=-1, keepdims=True)
        e = jnp.exp(rmin - energy)
    denom = jnp.sum(e, axis=-1, keepdims=True)
    # approx=True (EUP vrcp) is a free drop-in at ~1e-3 accuracy; kept exact so
    # f32 inputs stay safely within 1e-4 verification tolerance.
    return e * pl.reciprocal(denom, approx=False)


# ---------------------------------------------------------------------------
# Fused path: whole (Cp, Np) slab resident per batch — one kernel, one x read.
# ---------------------------------------------------------------------------
def _cam_fused_kernel(gamma_ref, x_ref, o_ref, *, num_valid):
    x = x_ref[...]                                        # (Cp, Np), native dtype
    # energy = X @ X^T: contract over the spatial axis of both operands
    # directly on the MXU (no explicit transpose).
    energy = lax.dot_general(
        x, x, dimension_numbers=(((1,), (1,)), ((), ())),
        preferred_element_type=jnp.float32)
    attn = _softmax_from_energy(energy, num_valid)
    out = jnp.dot(attn.astype(x.dtype), x, preferred_element_type=jnp.float32)
    o_ref[...] = (gamma_ref[0] * out + x.astype(jnp.float32)).astype(o_ref.dtype)


# ---------------------------------------------------------------------------
# Pass 1 (two-pass path): accumulate energy = X @ X^T over N tiles, then the
# masked fused softmax, accumulating directly in the resident output block.
# ---------------------------------------------------------------------------
def _cam_attn_kernel(x_ref, attn_ref, *acc, num_valid):
    # f32 attention: accumulate straight into attn_ref (no scratch, no copy).
    # bf16 attention: a f32 scratch accumulator is passed in.
    acc_ref = acc[0] if acc else attn_ref
    nt = pl.program_id(1)

    @pl.when(nt == 0)
    def _():
        acc_ref[...] = jnp.zeros_like(acc_ref)

    x = x_ref[...]                                        # (Cp, TN), native dtype
    acc_ref[...] += lax.dot_general(
        x, x, dimension_numbers=(((1,), (1,)), ((), ())),
        preferred_element_type=jnp.float32)

    @pl.when(nt == pl.num_programs(1) - 1)
    def _():
        attn = _softmax_from_energy(acc_ref[...], num_valid)
        attn_ref[...] = attn.astype(attn_ref.dtype)


# ---------------------------------------------------------------------------
# Pass 2 (two-pass path): out_tile = gamma * (attention @ x_tile) + x_tile
# ---------------------------------------------------------------------------
def _cam_out_kernel(gamma_ref, attn_ref, x_ref, o_ref):
    x = x_ref[...]                                        # (Cp, TN), native dtype
    attn = attn_ref[...].astype(x.dtype)                  # no-op cast in both paths
    out = jnp.dot(attn, x, preferred_element_type=jnp.float32)
    o_ref[...] = (gamma_ref[0] * out + x.astype(jnp.float32)).astype(o_ref.dtype)


def cam_module(x, gamma, *, tile_n=None, vmem_limit_bytes=None,
               force_two_pass=False):
    """Channel attention forward. x: (B, C, H, W), gamma: (1,). Returns (B, C, H, W)."""
    B, C, H, W = x.shape
    N = H * W
    itemsize = jnp.dtype(x.dtype).itemsize
    if vmem_limit_bytes is None:
        vmem_limit_bytes = _vmem_limit_bytes()

    # Pad channels to sublane granularity (8 for f32, 16 for bf16); pad the
    # spatial dim only to lane granularity (128).
    sub = max(8, 32 // itemsize)
    Cp = _round_up(max(C, sub), sub)
    Np = _round_up(N, 128)

    # Attention stored in bf16 when the input is bf16 (halves attn HBM traffic
    # and the pass-2 attention buffer); f32 otherwise for 1e-4 accuracy.
    attn_dtype = jnp.bfloat16 if jnp.dtype(x.dtype) == jnp.bfloat16 else jnp.float32
    attn_itemsize = jnp.dtype(attn_dtype).itemsize

    gamma = gamma.astype(jnp.float32)
    x_flat = x.reshape(B, C, N)

    # ------------------------------------------------------------------ fused
    fused_bytes = (4 * Cp * Np * itemsize     # double-buffered in + out slabs
                   + Cp * Np * 4              # f32 intermediate of attn @ X
                   + 3 * Cp * Cp * 4)         # energy / attention temporaries
    use_fused = (not force_two_pass) and fused_bytes <= vmem_limit_bytes // 2

    if use_fused:
        x_pad = (jnp.pad(x_flat, ((0, 0), (0, Cp - C), (0, Np - N)))
                 if (Cp != C or Np != N) else x_flat)
        out_flat = pl.pallas_call(
            functools.partial(_cam_fused_kernel, num_valid=C),
            out_shape=jax.ShapeDtypeStruct((B, Cp, Np), x.dtype),
            grid=(B,),
            in_specs=[
                pl.BlockSpec(memory_space=pltpu.MemorySpace.SMEM),       # gamma
                pl.BlockSpec((pl.Squeezed(), Cp, Np), lambda b: (b, 0, 0)),
            ],
            out_specs=pl.BlockSpec((pl.Squeezed(), Cp, Np), lambda b: (b, 0, 0)),
            compiler_params=pltpu.CompilerParams(
                dimension_semantics=("parallel",),
                vmem_limit_bytes=vmem_limit_bytes),
            cost_estimate=pl.CostEstimate(
                flops=4 * B * Cp * Cp * Np,
                transcendentals=B * Cp * Cp,
                bytes_accessed=2 * B * Cp * Np * itemsize),
        )(gamma, x_pad)
        if Cp != C or Np != N:
            out_flat = out_flat[:, :C, :N]
        return out_flat.reshape(B, C, H, W)

    # --------------------------------------------------------------- two-pass
    # Byte-capped spatial tile; tile_n chosen to divide Np so (almost) no extra
    # spatial padding / HBM traffic inflation.
    if tile_n is None:
        reserved = 3 * Cp * Cp * 4 + 2 * 1024 * 1024
        tile_budget = max(512 * 1024, (vmem_limit_bytes - reserved) // 6)
        tn_cap = max(128, min(Np, (tile_budget // (Cp * itemsize)) // 128 * 128))
        tile_n, Np = _choose_tiling(Np, tn_cap)
    else:
        Np = _round_up(Np, tile_n)
    n_tiles = Np // tile_n

    x_pad = (jnp.pad(x_flat, ((0, 0), (0, Cp - C), (0, Np - N)))
             if (Cp != C or Np != N) else x_flat)

    # ---- Pass 1: attention = softmax(rowmax(E) - E), E = X @ X^T ------------
    # TODO(synk): at B=1 on v7x, add a parallel channel-row-block grid axis so
    # both TensorCores share the energy matmul when C is large / MXU-bound.
    attn = pl.pallas_call(
        functools.partial(_cam_attn_kernel, num_valid=C),
        out_shape=jax.ShapeDtypeStruct((B, Cp, Cp), attn_dtype),
        grid=(B, n_tiles),
        in_specs=[
            pl.BlockSpec((pl.Squeezed(), Cp, tile_n), lambda b, n: (b, 0, n),
                         pipeline_mode=pl.Buffered(3)),
        ],
        out_specs=pl.BlockSpec((pl.Squeezed(), Cp, Cp), lambda b, n: (b, 0, 0)),
        scratch_shapes=([] if attn_dtype == jnp.float32
                        else [pltpu.VMEM((Cp, Cp), jnp.float32)]),
        compiler_params=pltpu.CompilerParams(
            dimension_semantics=("parallel", "arbitrary"),
            vmem_limit_bytes=vmem_limit_bytes),
        cost_estimate=pl.CostEstimate(
            flops=2 * B * Cp * Cp * Np,
            transcendentals=B * Cp * Cp,
            bytes_accessed=B * Cp * Np * itemsize + B * Cp * Cp * attn_itemsize),
    )(x_pad)

    # ---- Pass 2: out = gamma * (attention @ X) + X ---------------------------
    out_flat = pl.pallas_call(
        _cam_out_kernel,
        out_shape=jax.ShapeDtypeStruct((B, Cp, Np), x.dtype),
        grid=(B, n_tiles),
        in_specs=[
            pl.BlockSpec(memory_space=pltpu.MemorySpace.SMEM),           # gamma
            # Attention block index is constant across the n axis -> a single
            # buffer suffices (halves its VMEM footprint).
            pl.BlockSpec((pl.Squeezed(), Cp, Cp), lambda b, n: (b, 0, 0),
                         pipeline_mode=pl.Buffered(1)),
            pl.BlockSpec((pl.Squeezed(), Cp, tile_n), lambda b, n: (b, 0, n),
                         pipeline_mode=pl.Buffered(3)),
        ],
        out_specs=pl.BlockSpec((pl.Squeezed(), Cp, tile_n), lambda b, n: (b, 0, n)),
        compiler_params=pltpu.CompilerParams(
            dimension_semantics=("parallel", "parallel"),
            vmem_limit_bytes=vmem_limit_bytes),
        cost_estimate=pl.CostEstimate(
            flops=2 * B * Cp * Cp * Np + 2 * B * Cp * Np,
            transcendentals=0,
            bytes_accessed=2 * B * Cp * Np * itemsize + B * Cp * Cp * attn_itemsize),
    )(gamma, attn, x_pad)

    if Cp != C or Np != N:
        out_flat = out_flat[:, :C, :N]
    return out_flat.reshape(B, C, H, W)


def _cam_reference(x, gamma):
    """Pure-JAX reference mirroring the PyTorch forward."""
    B, C, H, W = x.shape
    q = x.reshape(B, C, -1)                                # (B, C, N)
    energy = jnp.einsum('bcn,bdn->bcd', q, q)              # (B, C, C)
    energy_new = jnp.max(energy, axis=-1, keepdims=True) - energy
    attention = jax.nn.softmax(energy_new, axis=-1)
    out = jnp.einsum('bcd,bdn->bcn', attention, q).reshape(B, C, H, W)
    return gamma[0] * out + x


if __name__ == "__main__":
    key = jax.random.PRNGKey(0)
    B, C, H, W = 2, 4, 16, 16
    x = jax.random.normal(key, (B, C, H, W), dtype=jnp.float32)

    # Module __init__: gamma = zeros(1). Also test a nonzero gamma to exercise
    # the attention path, not just the residual.
    gamma_zero = jnp.zeros((1,), dtype=jnp.float32)
    gamma_test = jnp.array([0.5], dtype=jnp.float32)

    ref0 = _cam_reference(x, gamma_zero)
    ref1 = _cam_reference(x, gamma_test)

    # Fused single-kernel path (auto-selected for small shapes).
    out0 = jax.block_until_ready(cam_module(x, gamma_zero))
    out1 = jax.block_until_ready(cam_module(x, gamma_test))
    assert out0.shape == x.shape and out0.dtype == x.dtype
    assert jnp.allclose(out0, ref0, atol=1e-4, rtol=1e-4)
    assert jnp.allclose(out1, ref1, atol=1e-4, rtol=1e-4)

    # Two-pass N-tiled path (used for large shapes); force it so both code
    # paths are exercised on-device.
    out2 = jax.block_until_ready(cam_module(x, gamma_test, force_two_pass=True))
    assert jnp.allclose(out2, ref1, atol=1e-4, rtol=1e-4)

    print("KERNEL_OK")
</pallas_src>

<mosaic_0001>
module attributes {stable_mosaic.version = 11 : i64} {
  func.func @_cam_fused_kernel(%arg0: i32, %arg1: memref<1xf32, #tpu.memory_space<smem>>, %arg2: memref<1x8x256xf32, #tpu.memory_space<vmem>>, %arg3: memref<1x8x256xf32, #tpu.memory_space<vmem>>) attributes {dimension_semantics = [#tpu.dimension_semantics<parallel>], iteration_bounds = array<i64: 2>, scalar_prefetch = 0 : i64, scratch_operands = 0 : i64, tpu.core_type = #tpu.core_type<tc>, window_params = [{transform_indices = @transform_0, window_bounds = array<i64: 1>}, {transform_indices = @transform_1, window_bounds = array<i64: 1, 8, 256>}, {transform_indices = @transform_2, window_bounds = array<i64: 1, 8, 256>}]} {
    %c0 = arith.constant 0 : index
    %c0_0 = arith.constant 0 : index
    %c0_1 = arith.constant 0 : index
    %0 = vector.load %arg2[%c0, %c0_0, %c0_1] : memref<1x8x256xf32, #tpu.memory_space<vmem>>, vector<1x8x256xf32>
    %1 = vector.shape_cast %0 : vector<1x8x256xf32> to vector<8x256xf32>
    %cst = arith.constant dense<0.000000e+00> : vector<8x8xf32>
    %2 = tpu.matmul %1, %1, %cst {dimension_numbers = #tpu.dot_dimension_numbers<[1], [1], [0], [0], [0, 0, 1, 0], [], []>} : vector<8x256xf32>, vector<8x256xf32>, vector<8x8xf32> -> vector<8x8xf32>
    %3 = tpu.iota {dimensions = array<i32: 1>} : vector<8x8xi32>
    %c4_i32 = arith.constant 4 : i32
    %4 = vector.broadcast %c4_i32 : i32 to vector<8x8xi32>
    %5 = arith.cmpi slt, %3, %4 : vector<8x8xi32>
    %cst_2 = arith.constant 0x7F800000 : f32
    %6 = vector.broadcast %cst_2 : f32 to vector<8x8xf32>
    %7 = arith.select %5, %2, %6 : vector<8x8xi1>, vector<8x8xf32>
    %cst_3 = arith.constant dense<0x7F800000> : vector<8xf32>
    %8 = vector.multi_reduction <minimumf>, %7, %cst_3 [1] : vector<8x8xf32> to vector<8xf32>
    %9 = vector.shape_cast %8 : vector<8xf32> to vector<8x1xf32>
    %10 = vector.broadcast %9 : vector<8x1xf32> to vector<8x8xf32>
    %11 = arith.subf %10, %2 : vector<8x8xf32>
    %12 = math.exp %11 : vector<8x8xf32>
    %cst_4 = arith.constant 0.000000e+00 : f32
    %13 = vector.broadcast %cst_4 : f32 to vector<8x8xf32>
    %14 = arith.select %5, %12, %13 : vector<8x8xi1>, vector<8x8xf32>
    %cst_5 = arith.constant dense<0.000000e+00> : vector<8xf32>
    %15 = vector.multi_reduction <add>, %14, %cst_5 [1] : vector<8x8xf32> to vector<8xf32>
    %16 = vector.shape_cast %15 : vector<8xf32> to vector<8x1xf32>
    %17 = tpu.reciprocal %16 : vector<8x1xf32> -> vector<8x1xf32>
    %18 = vector.broadcast %17 : vector<8x1xf32> to vector<8x8xf32>
    %19 = arith.mulf %14, %18 : vector<8x8xf32>
    %cst_6 = arith.constant dense<0.000000e+00> : vector<8x256xf32>
    %20 = tpu.matmul %19, %1, %cst_6 {dimension_numbers = #tpu.dot_dimension_numbers<[1], [0], [0], [1], [0, 0, 1, 1], [], []>} : vector<8x8xf32>, vector<8x256xf32>, vector<8x256xf32> -> vector<8x256xf32>
    %c0_7 = arith.constant 0 : index
    %21 = memref.load %arg1[%c0_7] : memref<1xf32, #tpu.memory_space<smem>>
    %22 = vector.broadcast %21 : f32 to vector<8x256xf32>
    %23 = arith.mulf %22, %20 : vector<8x256xf32>
    %24 = arith.addf %23, %1 : vector<8x256xf32>
    %c0_8 = arith.constant 0 : index
    %c0_9 = arith.constant 0 : index
    %c0_10 = arith.constant 0 : index
    %25 = vector.load %arg3[%c0_8, %c0_9, %c0_10] : memref<1x8x256xf32, #tpu.memory_space<vmem>>, vector<1x8x256xf32>
    %26 = vector.shape_cast %25 : vector<1x8x256xf32> to vector<8x256xf32>
    %27 = vector.shape_cast %24 : vector<8x256xf32> to vector<1x8x256xf32>
    tpu.vector_store %arg3[%c0_8, %c0_9, %c0_10], %27 {strides = array<i32>} : memref<1x8x256xf32, #tpu.memory_space<vmem>>, vector<1x8x256xf32>,
    return
  }
  func.func @transform_0(%arg0: i32) -> i32 {
    %c0_i32 = arith.constant 0 : i32
    %c0_i32_0 = arith.constant 0 : i32
    return %c0_i32 : i32
  }
  func.func @transform_1(%arg0: i32) -> (i32, i32, i32) {
    %c0_i32 = arith.constant 0 : i32
    %c0_i32_0 = arith.constant 0 : i32
    %c0_i32_1 = arith.constant 0 : i32
    return %arg0, %c0_i32, %c0_i32_0 : i32, i32, i32
  }
  func.func @transform_2(%arg0: i32) -> (i32, i32, i32) {
    %c0_i32 = arith.constant 0 : i32
    %c0_i32_0 = arith.constant 0 : i32
    %c0_i32_1 = arith.constant 0 : i32
    return %arg0, %c0_i32, %c0_i32_0 : i32, i32, i32
  }
}

</mosaic_0001>

<llo_original>
// kernel: tpu_custom_call.1
$region0: #{tpu_custom_call.1}
  #allocation0 [shape = 'u32[]', space=smem, size = 0x4, offset = 0x4, fixed_abs, tag = 'smem constant byte address 0x4 - core index']
  #allocation1 [shape = 'u32[144,128]{1,0:T(1,128)}', space=vmem, size = 0x12000, scoped, tag = 'internal scratch']
  #allocation2 [shape = 'f32[1]{0:T(128)S(6)}', space=smem, size = 0x200, scoped, tag = 'scoped memory for tpu_custom_call.1']
  %s0 = inlined_call_operand.<no memory space> [shape: f32[1], index: 0, kind: input, shape index: {}]
  %s1 = inlined_call_operand.hbm [shape: f32[2,8,256], index: 1, kind: input, shape index: {}]
  %s2 = inlined_call_operand.hbm [shape: f32[2,8,256], index: 2, kind: output, shape index: {}]
  %s3 = sld [smem:[#allocation0]]
  $region45: #{tpu_custom_call.1} parent=0
    _
  %s5 = ssub.s32 1, %s3
  %s6 = scalar_select 0, %s5, %s3
  %7 = sst [smem:[#allocation2]] %s0
  $region1: #{tpu_custom_call.1} parent=0
    #allocation3 [shape = 'u8[16384]{0}', space=vmem, size = 0x4000, scoped, tag = 'input window, operand 1']
    #allocation4 [shape = 's32[2]{0}', space=sflag, size = 0x8, scoped, tag = 'scoped memory for tpu_custom_call.1']
    #allocation5 [shape = 's32[2]{0}', space=sflag, size = 0x8, scoped, tag = 'scoped memory for tpu_custom_call.1']
    #allocation6 [shape = 'u8[16384]{0}', space=vmem, size = 0x4000, scoped, tag = 'output window, operand 0']
    %8 = vsyncpa [#allocation4], 0
    %s9 = scalar_lea.sflag [#allocation4], 1
    %10 = vsyncpa %s9, 0
    %11 = vsyncpa [#allocation5], 0
    %s12 = scalar_lea.sflag [#allocation5], 1
    %13 = vsyncpa %s12, 0
    loop: start=0, step=1, limit=4
    $region2: #{tpu_custom_call.1} parent=1 // loop_pre_header
      _
    $region3: #{tpu_custom_call.1} parent=1 // loop_header
      %s15 = sphi 0, %s19
      %p16 = scmp.ge.s32.totalorder %s15, 4
      %s23 = sphi 0, %s23
      %s25 = sphi 0, %s23
      %s26 = sphi 0, %s25
      %s40 = sphi 0, %s26
      %s46 = sphi 0, %s48
      %s49 = sphi 0, %s46
      %s50 = sphi 0, %s49
      %s66 = sphi 0, %s50
      %s72 = sphi 0, %s74
      %s75 = sphi 0, %s72
      %s76 = sphi 0, %s75
      %s92 = sphi 0, %s76
    $region4: #{tpu_custom_call.1} parent=1 // loop_header_branch
      %18 = sbr.rel (%p16) target = $region8
    $region5: #{tpu_custom_call.1} parent=1 // loop_body
      %s20 = ssub.s32 %s15, 1
      %s21 = ssub.s32 %s15, 2
      %s22 = sadd.s32 %s15, 1
      %s24 = sadd.s32 %s23, 1
      %p27 = scmp.eq.s32.totalorder %s15, 1
      %p28 = scmp.ne.s32.totalorder %s23, %s25
      %p29 = scmp.eq.s32.totalorder %s15, 0
      %p30 = por %p28, %p29
      %p31 = scmp.ne.s32.totalorder %s23, %s25
      %p32 = scmp.eq.s32.totalorder %s20, 1
      %p33 = por %p31, %p32
      %p34 = scmp.ne.s32.totalorder %s25, %s26
      %p35 = scmp.eq.s32.totalorder %s20, 0
      %p36 = por %p34, %p35
      %p37 = scmp.ne.s32.totalorder %s25, %s26
      %p38 = scmp.eq.s32.totalorder %s21, 1
      %p39 = por %p37, %p38
      %p41 = scmp.ne.s32.totalorder %s26, %s40
      %p42 = scmp.eq.s32.totalorder %s21, 0
      %p43 = por %p41, %p42
      %s44 = ssub.s32 %s15, %s22
      %p45 = scmp.eq.s32.totalorder %s44, 0
      %s47 = sadd.s32 %s46, 1
      %s48 = scalar_select %p45, %s46, %s47
      %p51 = pneg %p45
      %p52 = scmp.eq.s32.totalorder %s15, 1
      %p53 = por %p51, %p52
      %p54 = scmp.ne.s32.totalorder %s46, %s49
      %p55 = scmp.eq.s32.totalorder %s15, 0
      %p56 = por %p54, %p55
      %p57 = scmp.ne.s32.totalorder %s46, %s49
      %p58 = scmp.eq.s32.totalorder %s20, 1
      %p59 = por %p57, %p58
      %p60 = scmp.ne.s32.totalorder %s49, %s50
      %p61 = scmp.eq.s32.totalorder %s20, 0
      %p62 = por %p60, %p61
      %p63 = scmp.ne.s32.totalorder %s49, %s50
      %p64 = scmp.eq.s32.totalorder %s21, 1
      %p65 = por %p63, %p64
      %p67 = scmp.ne.s32.totalorder %s50, %s66
      %p68 = scmp.eq.s32.totalorder %s21, 0
      %p69 = por %p67, %p68
      %s70 = ssub.s32 %s15, %s22
      %p71 = scmp.eq.s32.totalorder %s70, 0
      %s73 = sadd.s32 %s72, 1
      %s74 = scalar_select %p71, %s72, %s73
      %p77 = pneg %p71
      %p78 = scmp.eq.s32.totalorder %s15, 1
      %p79 = por %p77, %p78
      %p80 = scmp.ne.s32.totalorder %s72, %s75
      %p81 = scmp.eq.s32.totalorder %s15, 0
      %p82 = por %p80, %p81
      %p83 = scmp.ne.s32.totalorder %s72, %s75
      %p84 = scmp.eq.s32.totalorder %s20, 1
      %p85 = por %p83, %p84
      %p86 = scmp.ne.s32.totalorder %s75, %s76
      %p87 = scmp.eq.s32.totalorder %s20, 0
      %p88 = por %p86, %p87
      %p89 = scmp.ne.s32.totalorder %s75, %s76
      %p90 = scmp.eq.s32.totalorder %s21, 1
      %p91 = por %p89, %p90
      %p93 = scmp.ne.s32.totalorder %s76, %s92
      %p94 = scmp.eq.s32.totalorder %s21, 0
      %p95 = por %p93, %p94
      %p96 = scmp.le.s32.totalorder 1, %s15
      %p97 = scmp.lt.s32.totalorder %s15, 3
      %p98 = pnand %p96, %p97
      %p99 = pneg %p98
      // Predicated region
      $region9: #{tpu_custom_call.1} parent=5 // pred_check
        _
      $region10: #{tpu_custom_call.1} parent=5 // pred_check_branch
        %101 = sbr.rel (%p98) target = $region12
      $region11: #{tpu_custom_call.1} parent=5 // pred_region
        %s102 = ssub.s32 %s15, 1
        // Predicated region
        $region13: #{tpu_custom_call.1} parent=11 // pred_check
          %p103 = pneg %p36
        $region14: #{tpu_custom_call.1} parent=11 // pred_check_branch
          %105 = sbr.rel (%p103) target = $region16
        $region15: #{tpu_custom_call.1} parent=11 // pred_region
          _
        $region16: #{tpu_custom_call.1} parent=11 // pred_fallthru
          _
      $region12: #{tpu_custom_call.1} parent=5 // pred_fallthru
        _
      %p106 = scmp.lt.s32.totalorder %s15, 2
      // Predicated region
      $region17: #{tpu_custom_call.1} parent=5 // pred_check
        %p107 = pneg %p106
      $region18: #{tpu_custom_call.1} parent=5 // pred_check_branch
        %109 = sbr.rel (%p107) target = $region20
      $region19: #{tpu_custom_call.1} parent=5 // pred_region
        // Predicated region
        $region21: #{tpu_custom_call.1} parent=19 // pred_check
          %p110 = pneg %p56
        $region22: #{tpu_custom_call.1} parent=19 // pred_check_branch
          %112 = sbr.rel (%p110) target = $region24
        $region23: #{tpu_custom_call.1} parent=19 // pred_region
          %s113 = sand.u32 %s46, 1
          %s114 = scalar_lea.sflag [#allocation4], %s113
          %s115 = sand.u32 %s46, 1
          %s116 = smul.addr %s115, 16
          %s117 = scalar_lea.vmem [#allocation3], %s116
          %s119 = ssub.s32 256, 256
          %120 = vsyncadd %s114, %s119
          %s121 = smul.addr %s15, 2
          %s122 = smul.addr %s121, 128
          %s123 = scalar_lea.hbm %s1, %s122
          %s125 = sshll.u32 %s117, 4
          %s126 = int_to_ptr.vmem [resolvable:$true] %s125
          %128 = dma.hbm_to_vmem [thread:$0]  %s123, 256, %s126, %s114
        $region24: #{tpu_custom_call.1} parent=19 // pred_fallthru
          _
      $region20: #{tpu_custom_call.1} parent=5 // pred_fallthru
        _
      %p129 = scmp.le.s32.totalorder 1, %s15
      %p130 = scmp.lt.s32.totalorder %s15, 3
      %p131 = pnand %p129, %p130
      %p132 = pneg %p131
      // Predicated region
      $region25: #{tpu_custom_call.1} parent=5 // pred_check
        _
      $region26: #{tpu_custom_call.1} parent=5 // pred_check_branch
        %134 = sbr.rel (%p131) target = $region28
      $region27: #{tpu_custom_call.1} parent=5 // pred_region
        %s135 = ssub.s32 %s15, 1
        %s136 = sand.u32 %s49, 1
        %s137 = scalar_lea.sflag [#allocation4], %s136
        %s138 = sand.u32 %s49, 1
        %s139 = smul.addr %s138, 16
        %s140 = scalar_lea.vmem [#allocation3], %s139
        // Predicated region
        $region29: #{tpu_custom_call.1} parent=27 // pred_check
          %p141 = pneg %p62
        $region30: #{tpu_custom_call.1} parent=27 // pred_check_branch
          %143 = sbr.rel (%p141) target = $region32
        $region31: #{tpu_custom_call.1} parent=27 // pred_region
          %144 = dma.done %s137, 256
        $region32: #{tpu_custom_call.1} parent=27 // pred_fallthru
          _
        %p145 = pneg %p36
        %p146 = pneg %p33
        %s147 = sand.u32 %s49, 1
        %s148 = scalar_lea.sflag [#allocation4], %s147
        %s149 = sand.u32 %s49, 1
        %s150 = smul.addr %s149, 16
        %s151 = scalar_lea.vmem [#allocation3], %s150
        %p152 = pneg %p62
        %p153 = pneg %p59
        %p154 = pneg %p88
        %p155 = pneg %p85
        %s156 = sand.u32 %s75, 1
        %s157 = scalar_lea.sflag [#allocation5], %s156
        %s158 = sand.u32 %s75, 1
        %s159 = smul.addr %s158, 16
        %s160 = scalar_lea.vmem [#allocation6], %s159
        %v161 = vld [vmem:[%s140] sm:$0xff]
        %v162 = vld [vmem:[%s140 + $0x8] sm:$0xff]
        %163 = vmatprep.subr.mxu0 0.0
        %164 = vmatpush1.xpose.msra.mxu0 0.0
        %165 = vmatprep.subr.mxu0 0.0
        %166 = vmatpush1.xpose.msra.mxu0 0.0
        %167 = vmatprep.subr.mxu0 0.0
        %168 = vmatpush1.xpose.msra.mxu0 0.0
        %169 = vmatprep.subr.mxu0 0.0
        %170 = vmatpush1.xpose.msra.mxu0 0.0
        %171 = vmatprep.subr.mxu0 0.0
        %172 = vmatpush1.xpose.msra.mxu0 0.0
        %173 = vmatprep.subr.mxu0 0.0
        %174 = vmatpush1.xpose.msra.mxu0 0.0
        %175 = vmatprep.subr.mxu0 0.0
        %176 = vmatpush1.xpose.msra.mxu0 0.0
        %177 = vmatprep.subr.mxu0 0.0
        %178 = vmatpush1.xpose.msra.mxu0 0.0
        %179 = vmatprep.subr.mxu0 0.0
        %180 = vmatpush1.xpose.msra.mxu0 0.0
        %181 = vmatprep.subr.mxu0 0.0
        %182 = vmatpush1.xpose.msra.mxu0 0.0
        %183 = vmatprep.subr.mxu0 0.0
        %184 = vmatpush1.xpose.msra.mxu0 0.0
        %185 = vmatprep.subr.mxu0 0.0
        %186 = vmatpush1.xpose.msra.mxu0 0.0
        %187 = vmatprep.subr.mxu0 0.0
        %188 = vmatpush1.xpose.msra.mxu0 0.0
        %189 = vmatprep.subr.mxu0 0.0
        %190 = vmatpush1.xpose.msra.mxu0 0.0
        %191 = vmatprep.subr.mxu0 0.0
        %192 = vmatpush1.xpose.msra.mxu0 0.0
        %193 = vmatprep.subr.mxu0 %v162
        %194 = vmatpush1.xpose.msra.mxu0 %v161
        %195 = vmatprep.subr.mxu0 0.0
        %196 = vmatpush2.xpose.msra.mxu0 0.0
        %197 = vmatprep.subr.mxu0 0.0
        %198 = vmatpush2.xpose.msra.mxu0 0.0
        %199 = vmatprep.subr.mxu0 0.0
        %200 = vmatpush2.xpose.msra.mxu0 0.0
        %201 = vmatprep.subr.mxu0 0.0
        %202 = vmatpush2.xpose.msra.mxu0 0.0
        %203 = vmatprep.subr.mxu0 0.0
        %204 = vmatpush2.xpose.msra.mxu0 0.0
        %205 = vmatprep.subr.mxu0 0.0
        %206 = vmatpush2.xpose.msra.mxu0 0.0
        %207 = vmatprep.subr.mxu0 0.0
        %208 = vmatpush2.xpose.msra.mxu0 0.0
        %209 = vmatprep.subr.mxu0 0.0
        %210 = vmatpush2.xpose.msra.mxu0 0.0
        %211 = vmatprep.subr.mxu0 0.0
        %212 = vmatpush2.xpose.msra.mxu0 0.0
        %213 = vmatprep.subr.mxu0 0.0
        %214 = vmatpush2.xpose.msra.mxu0 0.0
        %215 = vmatprep.subr.mxu0 0.0
        %216 = vmatpush2.xpose.msra.mxu0 0.0
        %217 = vmatprep.subr.mxu0 0.0
        %218 = vmatpush2.xpose.msra.mxu0 0.0
        %219 = vmatprep.subr.mxu0 0.0
        %220 = vmatpush2.xpose.msra.mxu0 0.0
        %221 = vmatprep.subr.mxu0 0.0
        %222 = vmatpush2.xpose.msra.mxu0 0.0
        %223 = vmatprep.subr.mxu0 0.0
        %224 = vmatpush2.xpose.msra.mxu0 0.0
        %225 = vmatprep.subr.mxu0 0.0
        %226 = vmatpush2.xpose.msra.mxu0 0.0
        %227 = vmatprep.mubr.f32.mxu0 %v162
        %228 = vmatmul.mubr.f32.gmra.mxu0 %v161
        %v229 = vpop.f32.mrf.mxu0
        %v230 = vadd.f32 0.0, %v229
        %v231 = vpop.f32.mrf.mxu0
        %232 = vdwg.mxu0
        %v233 = vlaneseq
        %v234 = vand.u32 %v233, 127
        %vm235 = vcmp.lt.s32.totalorder %v234, 4
        %v236 = vsel %vm235, %v230, inf
        %vm237 = vcmask 64512
        %v238 = vsel %vm237, %v236, inf
        %239 = vmin.xlane.f32.xlu0 %v238
        %v240 = vpop.xlane.xlu0 %239
        %v241 = vsub.f32 %v240, %v230
        %v242 = vmul.f32 %v241, 1.442695
        %v243 = vpow.pop %v242
        %v244 = vsel %vm235, %v243, 0.0
        %v245 = vsel %vm237, %v244, 0.0
        %246 = vadd.xlane.f32.xlu0 %v245
        %v247 = vpop.xlane.xlu0 %246
        %v248 = vrcp.pop %v247
        %v249 = vmul.f32 %v244, %v248
        %v251 = vsel %vm237, %v249, 0
        %253 = vmatprep.subr.mxu0 0.0
        %254 = vmatpush1.msra.mxu0 0.0
        %255 = vmatprep.subr.mxu0 0.0
        %256 = vmatpush1.msra.mxu0 0.0
        %257 = vmatprep.subr.mxu0 0.0
        %258 = vmatpush1.msra.mxu0 0.0
        %259 = vmatprep.subr.mxu0 0.0
        %260 = vmatpush1.msra.mxu0 0.0
        %261 = vmatprep.subr.mxu0 0.0
        %262 = vmatpush1.msra.mxu0 0.0
        %263 = vmatprep.subr.mxu0 0.0
        %264 = vmatpush1.msra.mxu0 0.0
        %265 = vmatprep.subr.mxu0 0.0
        %266 = vmatpush1.msra.mxu0 0.0
        %267 = vmatprep.subr.mxu0 0.0
        %268 = vmatpush1.msra.mxu0 0.0
        %269 = vmatprep.subr.mxu0 0.0
        %270 = vmatpush1.msra.mxu0 0.0
        %271 = vmatprep.subr.mxu0 0.0
        %272 = vmatpush1.msra.mxu0 0.0
        %273 = vmatprep.subr.mxu0 0.0
        %274 = vmatpush1.msra.mxu0 0.0
        %275 = vmatprep.subr.mxu0 0.0
        %276 = vmatpush1.msra.mxu0 0.0
        %277 = vmatprep.subr.mxu0 0.0
        %278 = vmatpush1.msra.mxu0 0.0
        %279 = vmatprep.subr.mxu0 0.0
        %280 = vmatpush1.msra.mxu0 0.0
        %281 = vmatprep.subr.mxu0 0.0
        %282 = vmatpush1.msra.mxu0 0.0
        %283 = vmatprep.subr.mxu0 %v162
        %284 = vmatpush1.msra.mxu0 %v161
        %285 = vmatprep.subr.mxu0 0.0
        %286 = vmatpush2.msra.mxu0 0.0
        %287 = vmatprep.subr.mxu0 0.0
        %288 = vmatpush2.msra.mxu0 0.0
        %289 = vmatprep.subr.mxu0 0.0
        %290 = vmatpush2.msra.mxu0 0.0
        %291 = vmatprep.subr.mxu0 0.0
        %292 = vmatpush2.msra.mxu0 0.0
        %293 = vmatprep.subr.mxu0 0.0
        %294 = vmatpush2.msra.mxu0 0.0
        %295 = vmatprep.subr.mxu0 0.0
        %296 = vmatpush2.msra.mxu0 0.0
        %297 = vmatprep.subr.mxu0 0.0
        %298 = vmatpush2.msra.mxu0 0.0
        %299 = vmatprep.subr.mxu0 0.0
        %300 = vmatpush2.msra.mxu0 0.0
        %301 = vmatprep.subr.mxu0 0.0
        %302 = vmatpush2.msra.mxu0 0.0
        %303 = vmatprep.subr.mxu0 0.0
        %304 = vmatpush2.msra.mxu0 0.0
        %305 = vmatprep.subr.mxu0 0.0
        %306 = vmatpush2.msra.mxu0 0.0
        %307 = vmatprep.subr.mxu0 0.0
        %308 = vmatpush2.msra.mxu0 0.0
        %309 = vmatprep.subr.mxu0 0.0
        %310 = vmatpush2.msra.mxu0 0.0
        %311 = vmatprep.subr.mxu0 0.0
        %312 = vmatpush2.msra.mxu0 0.0
        %313 = vmatprep.subr.mxu0 0.0
        %314 = vmatpush2.msra.mxu0 0.0
        %315 = vmatprep.subr.mxu0 0.0
        %316 = vmatpush2.msra.mxu0 0.0
        %317 = vmatprep.mubr.f32.mxu0 0.0
        %318 = vmatmul.mubr.f32.gmra.mxu0 %v251
        %v319 = vpop.f32.mrf.mxu0
        %v320 = vadd.f32 0.0, %v319
        %v321 = vpop.f32.mrf.mxu0
        %v322 = vadd.f32 0.0, %v321
        %323 = vdwg.mxu0
        %s324 = sld [smem:[#allocation2]]
        %v325 = vstv %s324
        %v326 = vmul.f32 %v325, %v320
        %v327 = vmul.f32 %v325, %v322
        %v328 = vadd.f32 %v326, %v161
        %v329 = vadd.f32 %v327, %v162
        %330 = vst [vmem:[%s160] sm:$0xff] %v328
        %331 = vst [vmem:[%s160 + $0x8] sm:$0xff] %v329
        %s332 = sand.u32 %s75, 1
        %s333 = scalar_lea.sflag [#allocation5], %s332
        %s334 = sand.u32 %s75, 1
        %s335 = smul.addr %s334, 16
        %s336 = scalar_lea.vmem [#allocation6], %s335
        // Predicated region
        $region33: #{tpu_custom_call.1} parent=27 // pred_check
          %p337 = pneg %p85
        $region34: #{tpu_custom_call.1} parent=27 // pred_check_branch
          %339 = sbr.rel (%p337) target = $region36
        $region35: #{tpu_custom_call.1} parent=27 // pred_region
          %s341 = ssub.s32 256, 256
          %342 = vsyncadd %s333, %s341
          %s343 = smul.addr %s20, 2
          %s344 = smul.addr %s343, 128
          %s345 = scalar_lea.hbm %s2, %s344
          %s347 = sshll.u32 %s336, 4
          %s348 = int_to_ptr.vmem [resolvable:$true] %s347
          %350 = dma.vmem_to_hbm [thread:$0]  %s348, 256, %s345, %s333
        $region36: #{tpu_custom_call.1} parent=27 // pred_fallthru
          _
      $region28: #{tpu_custom_call.1} parent=5 // pred_fallthru
        _
      %p351 = scmp.le.s32.totalorder 2, %s15
      // Predicated region
      $region37: #{tpu_custom_call.1} parent=5 // pred_check
        %p352 = pneg %p351
      $region38: #{tpu_custom_call.1} parent=5 // pred_check_branch
        %354 = sbr.rel (%p352) target = $region40
      $region39: #{tpu_custom_call.1} parent=5 // pred_region
        %s355 = ssub.s32 %s15, 2
        // Predicated region
        $region41: #{tpu_custom_call.1} parent=39 // pred_check
          %p356 = pneg %p91
        $region42: #{tpu_custom_call.1} parent=39 // pred_check_branch
          %358 = sbr.rel (%p356) target = $region44
        $region43: #{tpu_custom_call.1} parent=39 // pred_region
          %s359 = sand.u32 %s76, 1
          %s360 = scalar_lea.sflag [#allocation5], %s359
          %s361 = sand.u32 %s76, 1
          %s362 = smul.addr %s361, 16
          %s363 = scalar_lea.vmem [#allocation6], %s362
          %364 = dma.done %s360, 256
        $region44: #{tpu_custom_call.1} parent=39 // pred_fallthru
          _
      $region40: #{tpu_custom_call.1} parent=5 // pred_fallthru
        _
    $region6: #{tpu_custom_call.1} parent=1 // loop_footer
      %s19 = sadd.s32 1, %s15
    $region7: #{tpu_custom_call.1} parent=1 // loop_footer_branch
      %14 = sbr.rel target = $region3
    $region8: #{tpu_custom_call.1} parent=1 // loop_exit
      _
    %365 = vsyncpa [#allocation4], 1
    %s366 = scalar_lea.sflag [#allocation4], 1
    %367 = vsyncpa %s366, 1
    %368 = vsyncpa [#allocation5], 1
    %s369 = scalar_lea.sflag [#allocation5], 1
    %370 = vsyncpa %s369, 1

</llo_original>
